<compile_context>
chip_gen: v7x
topology: tpu7x:2x2x1
jax: 0.10.0
libtpu: 0.0.40
codegen_flags: <defaults>
</compile_context>

<pallas_src>
import functools

import jax
import jax.numpy as jnp
from jax import lax
from jax.experimental import pallas as pl
from jax.experimental.pallas import tpu as pltpu


def _round_up(v, m):
    return (v + m - 1) // m * m


def _all_opt_plus_kernel(M,  # static: number of real SEV reference rows
                         scal_ref, x_ref, o_ref, t_ref, valid_ref,
                         dm_ref, dmm_ref, w_ref, mean_ref,
                         losses_ref,
                         aw_ref, base_ref, bce_acc, num_acc, den_acc):
    i = pl.program_id(0)
    nsteps = pl.num_programs(0)

    bias = scal_ref[0]
    sev_pen = scal_ref[1]
    pos_pen = scal_ref[2]
    inv_n = scal_ref[3]          # 1 / (global N), for the BCE mean

    # ---------------- one-time precompute (hoisted out of the N loop) ----------------
    @pl.when(i == 0)
    def _init():
        dm = dm_ref[...]          # (M_ext, D_pad) f32; row M is all ones (the model(x) row)
        dmm = dmm_ref[...]        # (M_ext, D_pad) f32; rows >= M are zeros
        w = w_ref[...]            # (1, D_pad) f32
        is_zero = dm == 0.0       # exact f32 compare (data_map kept in f32)
        # a[m, d] = (dm[m,d] if dm[m,d] != 0 else 0) * w[d]   -> row M is just w
        aw_ref[...] = (jnp.where(is_zero, 0.0, dm) * w).astype(aw_ref.dtype)
        # base[m] = sum_d (dmm[m,d] if dm[m,d] == 0 else 0) * w[d] + bias  -> row M is bias
        base_ref[...] = jnp.sum(jnp.where(is_zero, dmm, 0.0) * w,
                                axis=1, keepdims=True) + bias
        bce_acc[...] = jnp.zeros_like(bce_acc)
        num_acc[...] = jnp.zeros_like(num_acc)
        den_acc[...] = jnp.zeros_like(den_acc)

    # ---------------- per-tile work ----------------
    x_t = x_ref[...]                                            # (TILE_N, D_pad)
    # One fused MXU matmul ('md,nd->mn'): rows 0..M-1 = SEV logits, row M = model(x).
    logits = lax.dot_general(aw_ref[...], x_t, (((1,), (1,)), ((), ())),
                             preferred_element_type=jnp.float32)  # (M_ext, TILE_N)
    logits = logits + base_ref[...]

    # sigmoid is monotone: max over M on logits first, one sigmoid on the maxima.
    max_logit = jnp.max(logits[:M, :], axis=0, keepdims=True)   # (1, TILE_N)
    y_logit = logits[M:M + 1, :]                                # (1, TILE_N)

    valid = valid_ref[...]                                      # (1, TILE_N) 1/0 mask
    # gt(sigmoid(l), 0.5)  <=>  l > 0  (no sigmoid needed for the positive mask)
    pos_mask = jnp.where(y_logit > 0.0, valid, 0.0)
    clipped = jnp.minimum(jax.nn.sigmoid(max_logit) - 0.5, 0.05)  # clamp(max=0.05)

    num_acc[...] += jnp.sum(clipped * pos_mask, axis=1, keepdims=True)
    den_acc[...] += jnp.sum(pos_mask, axis=1, keepdims=True)

    # BCE (reduction='mean', log clamped at -100), lane-dense (1, TILE_N) layout.
    o = o_ref[...]
    t = t_ref[...]
    log_o = jnp.maximum(jnp.log(o), -100.0)
    log_1mo = jnp.maximum(jnp.log(1.0 - o), -100.0)
    per_elem = -(t * log_o + (1.0 - t) * log_1mo) * valid
    bce_acc[...] += jnp.sum(per_elem, axis=1, keepdims=True)

    # ---------------- finalize ----------------
    @pl.when(i == nsteps - 1)
    def _fin():
        mean_logit = jnp.sum(mean_ref[...] * w_ref[...],
                             axis=1, keepdims=True) + bias        # (1, 1)
        pos_loss = pos_pen * jnp.maximum(jax.nn.sigmoid(mean_logit) - 0.5, -0.05)
        sev_loss = sev_pen * (-num_acc[...] / (den_acc[...] + 1e-10))
        bce_loss = bce_acc[...] * inv_n
        total = bce_loss + sev_loss + pos_loss
        rows = lax.broadcasted_iota(jnp.int32, (4, 1), 0)
        losses_ref[...] = jnp.where(rows == 0, bce_loss,
                          jnp.where(rows == 1, sev_loss,
                          jnp.where(rows == 2, pos_loss, total)))


def all_opt_plus_forward(output, target, x, *, weight, bias, data_map,
                         data_mean_map, data_mean, sev_penalty, positive_penalty,
                         matmul_dtype=jnp.float32, tile_n=512):
    """Returns (bce_loss, bce + sev + positive (shape (1,1)), sev_loss) like the torch module.

    Set matmul_dtype=jnp.bfloat16 on v6e/v7x for the MXU/HBM win (f32 accumulation kept).
    """
    f32 = jnp.float32
    N, D = x.shape
    M = data_map.shape[0]

    D_pad = _round_up(D, 128)                        # lane axis of the contraction
    esize = jnp.dtype(matmul_dtype).itemsize
    # Cap the tile so the double-buffered x tile stays within ~8 MiB (safe on v5e too).
    max_tile = max(128, ((8 << 20) // (2 * D_pad * esize)) // 128 * 128)
    TILE_N = min(tile_n, max_tile, _round_up(N, 128))
    N_pad = _round_up(N, TILE_N)
    M_ext = _round_up(M + 1, 8)                      # +1 fused model(x) row, sublane aligned
    n_tiles = N_pad // TILE_N

    # --- feature-padded parameters (zero padding is inert for every dot / mask) ---
    w_p = jnp.pad(weight.astype(f32).reshape(1, -1), ((0, 0), (0, D_pad - D)))
    mean_p = jnp.pad(jnp.reshape(data_mean, (1, -1)).astype(f32),
                     ((0, 0), (0, D_pad - D)))
    dm_p = jnp.pad(data_map.astype(f32), ((0, 0), (0, D_pad - D)))
    dmm_p = jnp.pad(data_mean_map.astype(f32), ((0, 0), (0, D_pad - D)))
    # Fused model(x) row: ones row in data_map / zeros row in data_mean_map makes the
    # kernel's precompute yield w with zero base at row M.  Rows M+1..M_ext-1 are dummies.
    dm_ext = jnp.concatenate([dm_p, jnp.ones((M_ext - M, D_pad), f32)], axis=0)
    dmm_ext = jnp.concatenate([dmm_p, jnp.zeros((M_ext - M, D_pad), f32)], axis=0)

    # --- batch-padded activations; x kept in natural (N, D) layout (no host transpose) ---
    x_p = jnp.pad(x.astype(matmul_dtype), ((0, N_pad - N), (0, D_pad - D)))
    out_r = jnp.pad(jnp.reshape(output.astype(f32), (1, N)),
                    ((0, 0), (0, N_pad - N)), constant_values=0.5)
    tgt_r = jnp.pad(jnp.reshape(target.astype(f32), (1, N)),
                    ((0, 0), (0, N_pad - N)))
    valid = (jnp.arange(N_pad) < N).astype(f32).reshape(1, N_pad)

    scal = jnp.stack([jnp.asarray(v, f32).reshape(()) for v in
                      (bias, sev_penalty, positive_penalty, 1.0 / N)])

    kernel = functools.partial(_all_opt_plus_kernel, M)

    def resident(r, c):
        return pl.BlockSpec((r, c), lambda i: (0, 0))

    losses = pl.pallas_call(
        kernel,
        grid=(n_tiles,),
        out_shape=jax.ShapeDtypeStruct((4, 1), f32),
        in_specs=[
            pl.BlockSpec(memory_space=pltpu.MemorySpace.SMEM),      # scalars
            pl.BlockSpec((TILE_N, D_pad), lambda i: (i, 0)),        # x tile (natural layout)
            pl.BlockSpec((1, TILE_N), lambda i: (0, i)),            # output (probs)
            pl.BlockSpec((1, TILE_N), lambda i: (0, i)),            # target
            pl.BlockSpec((1, TILE_N), lambda i: (0, i)),            # valid mask
            resident(M_ext, D_pad),                                 # data_map (ext)
            resident(M_ext, D_pad),                                 # data_mean_map (ext)
            resident(1, D_pad),                                     # weight
            resident(1, D_pad),                                     # data_mean
        ],
        out_specs=pl.BlockSpec((4, 1), lambda i: (0, 0)),
        scratch_shapes=[
            pltpu.VMEM((M_ext, D_pad), matmul_dtype),   # fused masked-map * w
            pltpu.VMEM((M_ext, 1), jnp.float32),        # base logits (+bias)
            pltpu.VMEM((1, 1), jnp.float32),            # BCE sum accumulator
            pltpu.VMEM((1, 1), jnp.float32),            # SEV numerator accumulator
            pltpu.VMEM((1, 1), jnp.float32),            # SEV denominator accumulator
        ],
        compiler_params=pltpu.CompilerParams(
            dimension_semantics=("arbitrary",)),
    )(scal, x_p, out_r, tgt_r, valid, dm_ext, dmm_ext, w_p, mean_p)

    bce_s = losses[0, 0]
    sev_s = losses[1, 0]
    total = jnp.reshape(losses[3, 0], (1, 1))   # matches torch broadcasting of positive_loss
    return bce_s, total, sev_s


if __name__ == "__main__":
    key = jax.random.PRNGKey(0)
    k1, k2, k3, k4, k5, k6 = jax.random.split(key, 6)

    N, D, M = 8, 16, 8   # batch, features, number of SEV reference rows

    # Synthetic deterministic "model" parameters (logistic regression + SEV attrs).
    weight = 0.5 * jax.random.normal(k1, (1, D), dtype=jnp.float32)
    bias = 0.1
    data_map = jax.random.bernoulli(k2, 0.5, (M, D)).astype(jnp.float32)
    data_mean = jax.random.normal(k3, (D,), dtype=jnp.float32)
    data_mean_map = jnp.broadcast_to(data_mean, (M, D))
    sev_penalty = 0.1
    positive_penalty = 0.1

    # Forward-pass inputs.
    x = jax.random.normal(k4, (N, D), dtype=jnp.float32)
    output = jax.nn.sigmoid(jax.random.normal(k5, (N, 1), dtype=jnp.float32))
    target = jax.random.bernoulli(k6, 0.5, (N, 1)).astype(jnp.float32)

    bce_loss, total_loss, sev_loss = all_opt_plus_forward(
        output, target, x,
        weight=weight, bias=bias, data_map=data_map,
        data_mean_map=data_mean_map, data_mean=data_mean,
        sev_penalty=sev_penalty, positive_penalty=positive_penalty)

    jax.block_until_ready((bce_loss, total_loss, sev_loss))
    print("KERNEL_OK")
</pallas_src>

<mosaic_0001>
module attributes {stable_mosaic.version = 11 : i64} {
  func.func @_all_opt_plus_kernel(%arg0: i32, %arg1: memref<4xf32, #tpu.memory_space<smem>>, %arg2: memref<128x128xf32, #tpu.memory_space<vmem>>, %arg3: memref<1x128xf32, #tpu.memory_space<vmem>>, %arg4: memref<1x128xf32, #tpu.memory_space<vmem>>, %arg5: memref<1x128xf32, #tpu.memory_space<vmem>>, %arg6: memref<16x128xf32, #tpu.memory_space<vmem>>, %arg7: memref<16x128xf32, #tpu.memory_space<vmem>>, %arg8: memref<1x128xf32, #tpu.memory_space<vmem>>, %arg9: memref<1x128xf32, #tpu.memory_space<vmem>>, %arg10: memref<4x1xf32, #tpu.memory_space<vmem>>, %arg11: memref<16x128xf32, #tpu.memory_space<vmem>>, %arg12: memref<16x1xf32, #tpu.memory_space<vmem>>, %arg13: memref<1x1xf32, #tpu.memory_space<vmem>>, %arg14: memref<1x1xf32, #tpu.memory_space<vmem>>, %arg15: memref<1x1xf32, #tpu.memory_space<vmem>>) attributes {dimension_semantics = [#tpu.dimension_semantics<arbitrary>], iteration_bounds = array<i64: 1>, scalar_prefetch = 0 : i64, scratch_operands = 5 : i64, tpu.core_type = #tpu.core_type<tc>, window_params = [{transform_indices = @transform_0, window_bounds = array<i64: 4>}, {transform_indices = @transform_1, window_bounds = array<i64: 128, 128>}, {transform_indices = @transform_2, window_bounds = array<i64: 1, 128>}, {transform_indices = @transform_3, window_bounds = array<i64: 1, 128>}, {transform_indices = @transform_4, window_bounds = array<i64: 1, 128>}, {pipeline_mode = #tpu.pipeline_mode<synchronous>, transform_indices = @transform_5, window_bounds = array<i64: 16, 128>}, {pipeline_mode = #tpu.pipeline_mode<synchronous>, transform_indices = @transform_6, window_bounds = array<i64: 16, 128>}, {pipeline_mode = #tpu.pipeline_mode<synchronous>, transform_indices = @transform_7, window_bounds = array<i64: 1, 128>}, {pipeline_mode = #tpu.pipeline_mode<synchronous>, transform_indices = @transform_8, window_bounds = array<i64: 1, 128>}, {pipeline_mode = #tpu.pipeline_mode<synchronous>, transform_indices = @transform_9, window_bounds = array<i64: 4, 1>}]} {
    %c0 = arith.constant 0 : index
    %0 = memref.load %arg1[%c0] : memref<4xf32, #tpu.memory_space<smem>>
    %c1 = arith.constant 1 : index
    %1 = memref.load %arg1[%c1] : memref<4xf32, #tpu.memory_space<smem>>
    %c2 = arith.constant 2 : index
    %2 = memref.load %arg1[%c2] : memref<4xf32, #tpu.memory_space<smem>>
    %c3 = arith.constant 3 : index
    %3 = memref.load %arg1[%c3] : memref<4xf32, #tpu.memory_space<smem>>
    %c0_i32 = arith.constant 0 : i32
    %4 = arith.cmpi eq, %arg0, %c0_i32 : i32
    %5 = arith.extui %4 : i1 to i32
    %c0_i32_0 = arith.constant 0 : i32
    %6 = arith.cmpi ne, %5, %c0_i32_0 : i32
    scf.if %6 {
      %c0_41 = arith.constant 0 : index
      %c0_42 = arith.constant 0 : index
      %68 = vector.load %arg6[%c0_41, %c0_42] : memref<16x128xf32, #tpu.memory_space<vmem>>, vector<16x128xf32>
      %c0_43 = arith.constant 0 : index
      %c0_44 = arith.constant 0 : index
      %69 = vector.load %arg7[%c0_43, %c0_44] : memref<16x128xf32, #tpu.memory_space<vmem>>, vector<16x128xf32>
      %c0_45 = arith.constant 0 : index
      %c0_46 = arith.constant 0 : index
      %70 = vector.load %arg8[%c0_45, %c0_46] : memref<1x128xf32, #tpu.memory_space<vmem>>, vector<1x128xf32>
      %cst_47 = arith.constant 0.000000e+00 : f32
      %71 = vector.broadcast %cst_47 : f32 to vector<16x128xf32>
      %72 = arith.cmpf oeq, %68, %71 : vector<16x128xf32>
      %cst_48 = arith.constant 0.000000e+00 : f32
      %73 = vector.broadcast %cst_48 : f32 to vector<16x128xf32>
      %74 = arith.select %72, %73, %68 : vector<16x128xi1>, vector<16x128xf32>
      %75 = vector.broadcast %70 : vector<1x128xf32> to vector<16x128xf32>
      %76 = arith.mulf %74, %75 : vector<16x128xf32>
      %c0_49 = arith.constant 0 : index
      %c0_50 = arith.constant 0 : index
      %77 = vector.load %arg11[%c0_49, %c0_50] : memref<16x128xf32, #tpu.memory_space<vmem>>, vector<16x128xf32>
      tpu.vector_store %arg11[%c0_49, %c0_50], %76 {strides = array<i32>} : memref<16x128xf32, #tpu.memory_space<vmem>>, vector<16x128xf32>,
      %cst_51 = arith.constant 0.000000e+00 : f32
      %78 = vector.broadcast %cst_51 : f32 to vector<16x128xf32>
      %79 = arith.select %72, %69, %78 : vector<16x128xi1>, vector<16x128xf32>
      %80 = vector.broadcast %70 : vector<1x128xf32> to vector<16x128xf32>
      %81 = arith.mulf %79, %80 : vector<16x128xf32>
      %cst_52 = arith.constant dense<0.000000e+00> : vector<16xf32>
      %82 = vector.multi_reduction <add>, %81, %cst_52 [1] : vector<16x128xf32> to vector<16xf32>
      %83 = vector.shape_cast %82 : vector<16xf32> to vector<16x1xf32>
      %84 = vector.broadcast %0 : f32 to vector<16x1xf32>
      %85 = arith.addf %83, %84 : vector<16x1xf32>
      %c0_53 = arith.constant 0 : index
      %c0_54 = arith.constant 0 : index
      %86 = vector.load %arg12[%c0_53, %c0_54] : memref<16x1xf32, #tpu.memory_space<vmem>>, vector<16x1xf32>
      tpu.vector_store %arg12[%c0_53, %c0_54], %85 {strides = array<i32>} : memref<16x1xf32, #tpu.memory_space<vmem>>, vector<16x1xf32>,
      %cst_55 = arith.constant 0.000000e+00 : f32
      %87 = vector.broadcast %cst_55 : f32 to vector<1x1xf32>
      %c0_56 = arith.constant 0 : index
      %c0_57 = arith.constant 0 : index
      %88 = vector.load %arg13[%c0_56, %c0_57] : memref<1x1xf32, #tpu.memory_space<vmem>>, vector<1x1xf32>
      tpu.vector_store %arg13[%c0_56, %c0_57], %87 {strides = array<i32>} : memref<1x1xf32, #tpu.memory_space<vmem>>, vector<1x1xf32>,
      %cst_58 = arith.constant 0.000000e+00 : f32
      %89 = vector.broadcast %cst_58 : f32 to vector<1x1xf32>
      %c0_59 = arith.constant 0 : index
      %c0_60 = arith.constant 0 : index
      %90 = vector.load %arg14[%c0_59, %c0_60] : memref<1x1xf32, #tpu.memory_space<vmem>>, vector<1x1xf32>
      tpu.vector_store %arg14[%c0_59, %c0_60], %89 {strides = array<i32>} : memref<1x1xf32, #tpu.memory_space<vmem>>, vector<1x1xf32>,
      %cst_61 = arith.constant 0.000000e+00 : f32
      %91 = vector.broadcast %cst_61 : f32 to vector<1x1xf32>
      %c0_62 = arith.constant 0 : index
      %c0_63 = arith.constant 0 : index
      %92 = vector.load %arg15[%c0_62, %c0_63] : memref<1x1xf32, #tpu.memory_space<vmem>>, vector<1x1xf32>
      tpu.vector_store %arg15[%c0_62, %c0_63], %91 {strides = array<i32>} : memref<1x1xf32, #tpu.memory_space<vmem>>, vector<1x1xf32>,
    } else {
    }
    %c0_1 = arith.constant 0 : index
    %c0_2 = arith.constant 0 : index
    %7 = vector.load %arg2[%c0_1, %c0_2] : memref<128x128xf32, #tpu.memory_space<vmem>>, vector<128x128xf32>
    %c0_3 = arith.constant 0 : index
    %c0_4 = arith.constant 0 : index
    %8 = vector.load %arg11[%c0_3, %c0_4] : memref<16x128xf32, #tpu.memory_space<vmem>>, vector<16x128xf32>
    %cst = arith.constant dense<0.000000e+00> : vector<16x128xf32>
    %9 = tpu.matmul %8, %7, %cst {dimension_numbers = #tpu.dot_dimension_numbers<[1], [1], [0], [0], [0, 0, 1, 0], [], []>} : vector<16x128xf32>, vector<128x128xf32>, vector<16x128xf32> -> vector<16x128xf32>
    %c0_5 = arith.constant 0 : index
    %c0_6 = arith.constant 0 : index
    %10 = vector.load %arg12[%c0_5, %c0_6] : memref<16x1xf32, #tpu.memory_space<vmem>>, vector<16x1xf32>
    %11 = vector.broadcast %10 : vector<16x1xf32> to vector<16x128xf32>
    %12 = arith.addf %9, %11 : vector<16x128xf32>
    %13 = vector.extract_strided_slice %12 {offsets = [0, 0], sizes = [8, 128], strides = [1, 1]} : vector<16x128xf32> to vector<8x128xf32>
    %cst_7 = arith.constant dense<0xFF800000> : vector<128xf32>
    %14 = vector.multi_reduction <maximumf>, %13, %cst_7 [0] : vector<8x128xf32> to vector<128xf32>
    %15 = vector.shape_cast %14 : vector<128xf32> to vector<1x128xf32>
    %16 = vector.extract_strided_slice %12 {offsets = [8, 0], sizes = [1, 128], strides = [1, 1]} : vector<16x128xf32> to vector<1x128xf32>
    %c0_8 = arith.constant 0 : index
    %c0_9 = arith.constant 0 : index
    %17 = vector.load %arg5[%c0_8, %c0_9] : memref<1x128xf32, #tpu.memory_space<vmem>>, vector<1x128xf32>
    %cst_10 = arith.constant 0.000000e+00 : f32
    %18 = vector.broadcast %cst_10 : f32 to vector<1x128xf32>
    %19 = arith.cmpf ogt, %16, %18 : vector<1x128xf32>
    %cst_11 = arith.constant 0.000000e+00 : f32
    %20 = vector.broadcast %cst_11 : f32 to vector<1x128xf32>
    %21 = arith.select %19, %17, %20 : vector<1x128xi1>, vector<1x128xf32>
    %22 = arith.negf %15 : vector<1x128xf32>
    %23 = math.exp %22 : vector<1x128xf32>
    %cst_12 = arith.constant 1.000000e+00 : f32
    %24 = vector.broadcast %cst_12 : f32 to vector<1x128xf32>
    %25 = arith.addf %24, %23 : vector<1x128xf32>
    %26 = arith.divf %24, %25 : vector<1x128xf32>
    %cst_13 = arith.constant 5.000000e-01 : f32
    %27 = vector.broadcast %cst_13 : f32 to vector<1x128xf32>
    %28 = arith.subf %26, %27 : vector<1x128xf32>
    %cst_14 = arith.constant 5.000000e-02 : f32
    %29 = vector.broadcast %cst_14 : f32 to vector<1x128xf32>
    %30 = arith.minimumf %28, %29 : vector<1x128xf32>
    %c0_15 = arith.constant 0 : index
    %c0_16 = arith.constant 0 : index
    %31 = vector.load %arg14[%c0_15, %c0_16] : memref<1x1xf32, #tpu.memory_space<vmem>>, vector<1x1xf32>
    %32 = arith.mulf %30, %21 : vector<1x128xf32>
    %cst_17 = arith.constant dense<0.000000e+00> : vector<1xf32>
    %33 = vector.multi_reduction <add>, %32, %cst_17 [1] : vector<1x128xf32> to vector<1xf32>
    %34 = vector.shape_cast %33 : vector<1xf32> to vector<1x1xf32>
    %35 = arith.addf %31, %34 : vector<1x1xf32>
    %c0_18 = arith.constant 0 : index
    %c0_19 = arith.constant 0 : index
    %36 = vector.load %arg14[%c0_18, %c0_19] : memref<1x1xf32, #tpu.memory_space<vmem>>, vector<1x1xf32>
    tpu.vector_store %arg14[%c0_18, %c0_19], %35 {strides = array<i32>} : memref<1x1xf32, #tpu.memory_space<vmem>>, vector<1x1xf32>,
    %c0_20 = arith.constant 0 : index
    %c0_21 = arith.constant 0 : index
    %37 = vector.load %arg15[%c0_20, %c0_21] : memref<1x1xf32, #tpu.memory_space<vmem>>, vector<1x1xf32>
    %cst_22 = arith.constant dense<0.000000e+00> : vector<1xf32>
    %38 = vector.multi_reduction <add>, %21, %cst_22 [1] : vector<1x128xf32> to vector<1xf32>
    %39 = vector.shape_cast %38 : vector<1xf32> to vector<1x1xf32>
    %40 = arith.addf %37, %39 : vector<1x1xf32>
    %c0_23 = arith.constant 0 : index
    %c0_24 = arith.constant 0 : index
    %41 = vector.load %arg15[%c0_23, %c0_24] : memref<1x1xf32, #tpu.memory_space<vmem>>, vector<1x1xf32>
    tpu.vector_store %arg15[%c0_23, %c0_24], %40 {strides = array<i32>} : memref<1x1xf32, #tpu.memory_space<vmem>>, vector<1x1xf32>,
    %c0_25 = arith.constant 0 : index
    %c0_26 = arith.constant 0 : index
    %42 = vector.load %arg3[%c0_25, %c0_26] : memref<1x128xf32, #tpu.memory_space<vmem>>, vector<1x128xf32>
    %c0_27 = arith.constant 0 : index
    %c0_28 = arith.constant 0 : index
    %43 = vector.load %arg4[%c0_27, %c0_28] : memref<1x128xf32, #tpu.memory_space<vmem>>, vector<1x128xf32>
    %44 = math.log %42 : vector<1x128xf32>
    %cst_29 = arith.constant -1.000000e+02 : f32
    %45 = vector.broadcast %cst_29 : f32 to vector<1x128xf32>
    %46 = arith.maximumf %44, %45 : vector<1x128xf32>
    %cst_30 = arith.constant 1.000000e+00 : f32
    %47 = vector.broadcast %cst_30 : f32 to vector<1x128xf32>
    %48 = arith.subf %47, %42 : vector<1x128xf32>
    %49 = math.log %48 : vector<1x128xf32>
    %cst_31 = arith.constant -1.000000e+02 : f32
    %50 = vector.broadcast %cst_31 : f32 to vector<1x128xf32>
    %51 = arith.maximumf %49, %50 : vector<1x128xf32>
    %52 = arith.mulf %43, %46 : vector<1x128xf32>
    %cst_32 = arith.constant 1.000000e+00 : f32
    %53 = vector.broadcast %cst_32 : f32 to vector<1x128xf32>
    %54 = arith.subf %53, %43 : vector<1x128xf32>
    %55 = arith.mulf %54, %51 : vector<1x128xf32>
    %56 = arith.addf %52, %55 : vector<1x128xf32>
    %cst_33 = arith.constant 0.000000e+00 : f32
    %57 = vector.broadcast %cst_33 : f32 to vector<1x128xf32>
    %58 = arith.subf %57, %56 : vector<1x128xf32>
    %59 = arith.mulf %58, %17 : vector<1x128xf32>
    %c0_34 = arith.constant 0 : index
    %c0_35 = arith.constant 0 : index
    %60 = vector.load %arg13[%c0_34, %c0_35] : memref<1x1xf32, #tpu.memory_space<vmem>>, vector<1x1xf32>
    %cst_36 = arith.constant dense<0.000000e+00> : vector<1xf32>
    %61 = vector.multi_reduction <add>, %59, %cst_36 [1] : vector<1x128xf32> to vector<1xf32>
    %62 = vector.shape_cast %61 : vector<1xf32> to vector<1x1xf32>
    %63 = arith.addf %60, %62 : vector<1x1xf32>
    %c0_37 = arith.constant 0 : index
    %c0_38 = arith.constant 0 : index
    %64 = vector.load %arg13[%c0_37, %c0_38] : memref<1x1xf32, #tpu.memory_space<vmem>>, vector<1x1xf32>
    tpu.vector_store %arg13[%c0_37, %c0_38], %63 {strides = array<i32>} : memref<1x1xf32, #tpu.memory_space<vmem>>, vector<1x1xf32>,
    %c0_i32_39 = arith.constant 0 : i32
    %65 = arith.cmpi eq, %arg0, %c0_i32_39 : i32
    %66 = arith.extui %65 : i1 to i32
    %c0_i32_40 = arith.constant 0 : i32
    %67 = arith.cmpi ne, %66, %c0_i32_40 : i32
    scf.if %67 {
      %c0_41 = arith.constant 0 : index
      %c0_42 = arith.constant 0 : index
      %68 = vector.load %arg9[%c0_41, %c0_42] : memref<1x128xf32, #tpu.memory_space<vmem>>, vector<1x128xf32>
      %c0_43 = arith.constant 0 : index
      %c0_44 = arith.constant 0 : index
      %69 = vector.load %arg8[%c0_43, %c0_44] : memref<1x128xf32, #tpu.memory_space<vmem>>, vector<1x128xf32>
      %70 = arith.mulf %68, %69 : vector<1x128xf32>
      %cst_45 = arith.constant dense<0.000000e+00> : vector<1xf32>
      %71 = vector.multi_reduction <add>, %70, %cst_45 [1] : vector<1x128xf32> to vector<1xf32>
      %72 = vector.shape_cast %71 : vector<1xf32> to vector<1x1xf32>
      %73 = vector.broadcast %0 : f32 to vector<1x1xf32>
      %74 = arith.addf %72, %73 : vector<1x1xf32>
      %75 = arith.negf %74 : vector<1x1xf32>
      %76 = math.exp %75 : vector<1x1xf32>
      %cst_46 = arith.constant 1.000000e+00 : f32
      %77 = vector.broadcast %cst_46 : f32 to vector<1x1xf32>
      %78 = arith.addf %77, %76 : vector<1x1xf32>
      %79 = arith.divf %77, %78 : vector<1x1xf32>
      %cst_47 = arith.constant 5.000000e-01 : f32
      %80 = vector.broadcast %cst_47 : f32 to vector<1x1xf32>
      %81 = arith.subf %79, %80 : vector<1x1xf32>
      %cst_48 = arith.constant -5.000000e-02 : f32
      %82 = vector.broadcast %cst_48 : f32 to vector<1x1xf32>
      %83 = arith.maximumf %81, %82 : vector<1x1xf32>
      %84 = vector.broadcast %2 : f32 to vector<1x1xf32>
      %85 = arith.mulf %84, %83 : vector<1x1xf32>
      %c0_49 = arith.constant 0 : index
      %c0_50 = arith.constant 0 : index
      %86 = vector.load %arg14[%c0_49, %c0_50] : memref<1x1xf32, #tpu.memory_space<vmem>>, vector<1x1xf32>
      %cst_51 = arith.constant 0.000000e+00 : f32
      %87 = vector.broadcast %cst_51 : f32 to vector<1x1xf32>
      %88 = arith.subf %87, %86 : vector<1x1xf32>
      %c0_52 = arith.constant 0 : index
      %c0_53 = arith.constant 0 : index
      %89 = vector.load %arg15[%c0_52, %c0_53] : memref<1x1xf32, #tpu.memory_space<vmem>>, vector<1x1xf32>
      %cst_54 = arith.constant 1.000000e-10 : f32
      %90 = vector.broadcast %cst_54 : f32 to vector<1x1xf32>
      %91 = arith.addf %89, %90 : vector<1x1xf32>
      %92 = arith.divf %88, %91 : vector<1x1xf32>
      %93 = vector.broadcast %1 : f32 to vector<1x1xf32>
      %94 = arith.mulf %93, %92 : vector<1x1xf32>
      %c0_55 = arith.constant 0 : index
      %c0_56 = arith.constant 0 : index
      %95 = vector.load %arg13[%c0_55, %c0_56] : memref<1x1xf32, #tpu.memory_space<vmem>>, vector<1x1xf32>
      %96 = vector.broadcast %3 : f32 to vector<1x1xf32>
      %97 = arith.mulf %95, %96 : vector<1x1xf32>
      %98 = arith.addf %97, %94 : vector<1x1xf32>
      %99 = arith.addf %98, %85 : vector<1x1xf32>
      %100 = tpu.iota {dimensions = array<i32: 0>} : vector<4x1xi32>
      %c0_i32_57 = arith.constant 0 : i32
      %101 = vector.broadcast %c0_i32_57 : i32 to vector<4x1xi32>
      %102 = arith.cmpi eq, %100, %101 : vector<4x1xi32>
      %c1_i32 = arith.constant 1 : i32
      %103 = vector.broadcast %c1_i32 : i32 to vector<4x1xi32>
      %104 = arith.cmpi eq, %100, %103 : vector<4x1xi32>
      %c2_i32 = arith.constant 2 : i32
      %105 = vector.broadcast %c2_i32 : i32 to vector<4x1xi32>
      %106 = arith.cmpi eq, %100, %105 : vector<4x1xi32>
      %107 = vector.shape_cast %85 : vector<1x1xf32> to vector<1x1xf32>
      %108 = vector.broadcast %107 : vector<1x1xf32> to vector<4x1xf32>
      %109 = vector.shape_cast %99 : vector<1x1xf32> to vector<1x1xf32>
      %110 = vector.broadcast %109 : vector<1x1xf32> to vector<4x1xf32>
      %111 = arith.select %106, %108, %110 : vector<4x1xi1>, vector<4x1xf32>
      %112 = vector.shape_cast %94 : vector<1x1xf32> to vector<1x1xf32>
      %113 = vector.broadcast %112 : vector<1x1xf32> to vector<4x1xf32>
      %114 = arith.select %104, %113, %111 : vector<4x1xi1>, vector<4x1xf32>
      %115 = vector.shape_cast %97 : vector<1x1xf32> to vector<1x1xf32>
      %116 = vector.broadcast %115 : vector<1x1xf32> to vector<4x1xf32>
      %117 = arith.select %102, %116, %114 : vector<4x1xi1>, vector<4x1xf32>
      %c0_58 = arith.constant 0 : index
      %c0_59 = arith.constant 0 : index
      %118 = vector.load %arg10[%c0_58, %c0_59] : memref<4x1xf32, #tpu.memory_space<vmem>>, vector<4x1xf32>
      tpu.vector_store %arg10[%c0_58, %c0_59], %117 {strides = array<i32>} : memref<4x1xf32, #tpu.memory_space<vmem>>, vector<4x1xf32>,
    } else {
    }
    return
  }
  func.func @transform_0(%arg0: i32) -> i32 {
    %c0_i32 = arith.constant 0 : i32
    %c0_i32_0 = arith.constant 0 : i32
    return %c0_i32 : i32
  }
  func.func @transform_1(%arg0: i32) -> (i32, i32) {
    %c0_i32 = arith.constant 0 : i32
    %c0_i32_0 = arith.constant 0 : i32
    return %arg0, %c0_i32 : i32, i32
  }
  func.func @transform_2(%arg0: i32) -> (i32, i32) {
    %c0_i32 = arith.constant 0 : i32
    %c0_i32_0 = arith.constant 0 : i32
    return %c0_i32, %arg0 : i32, i32
  }
  func.func @transform_3(%arg0: i32) -> (i32, i32) {
    %c0_i32 = arith.constant 0 : i32
    %c0_i32_0 = arith.constant 0 : i32
    return %c0_i32, %arg0 : i32, i32
  }
  func.func @transform_4(%arg0: i32) -> (i32, i32) {
    %c0_i32 = arith.constant 0 : i32
    %c0_i32_0 = arith.constant 0 : i32
    return %c0_i32, %arg0 : i32, i32
  }
  func.func @transform_5(%arg0: i32) -> (i32, i32) {
    %c0_i32 = arith.constant 0 : i32
    %c0_i32_0 = arith.constant 0 : i32
    %c0_i32_1 = arith.constant 0 : i32
    return %c0_i32, %c0_i32_0 : i32, i32
  }
  func.func @transform_6(%arg0: i32) -> (i32, i32) {
    %c0_i32 = arith.constant 0 : i32
    %c0_i32_0 = arith.constant 0 : i32
    %c0_i32_1 = arith.constant 0 : i32
    return %c0_i32, %c0_i32_0 : i32, i32
  }
  func.func @transform_7(%arg0: i32) -> (i32, i32) {
    %c0_i32 = arith.constant 0 : i32
    %c0_i32_0 = arith.constant 0 : i32
    %c0_i32_1 = arith.constant 0 : i32
    return %c0_i32, %c0_i32_0 : i32, i32
  }
  func.func @transform_8(%arg0: i32) -> (i32, i32) {
    %c0_i32 = arith.constant 0 : i32
    %c0_i32_0 = arith.constant 0 : i32
    %c0_i32_1 = arith.constant 0 : i32
    return %c0_i32, %c0_i32_0 : i32, i32
  }
  func.func @transform_9(%arg0: i32) -> (i32, i32) {
    %c0_i32 = arith.constant 0 : i32
    %c0_i32_0 = arith.constant 0 : i32
    %c0_i32_1 = arith.constant 0 : i32
    return %c0_i32, %c0_i32_0 : i32, i32
  }
}

</mosaic_0001>

<llo_original>
// kernel: tpu_custom_call.1
$region0: #{tpu_custom_call.1}
  #allocation0 [shape = 'u32[]', space=smem, size = 0x4, offset = 0x4, fixed_abs, tag = 'smem constant byte address 0x4 - core index']
  #allocation1 [shape = 'u32[144,128]{1,0:T(1,128)}', space=vmem, size = 0x12000, scoped, tag = 'internal scratch']
  #allocation2 [shape = 'f32[16,128]{1,0:T(8,128)}', space=vmem, size = 0x2000, scoped, tag = 'scratch operand']
  #allocation3 [shape = 'f32[16,1]{1,0:T(8,128)}', space=vmem, size = 0x2000, scoped, tag = 'scratch operand']
  #allocation4 [shape = 'f32[1,1]{1,0:T(1,128)}', space=vmem, size = 0x200, scoped, tag = 'scratch operand']
  #allocation5 [shape = 'f32[1,1]{1,0:T(1,128)}', space=vmem, size = 0x200, scoped, tag = 'scratch operand']
  #allocation6 [shape = 'f32[1,1]{1,0:T(1,128)}', space=vmem, size = 0x200, scoped, tag = 'scratch operand']
  %s0 = inlined_call_operand.hbm [shape: f32[4], index: 0, kind: input, shape index: {}]
  %s1 = inlined_call_operand.hbm [shape: f32[128,128], index: 1, kind: input, shape index: {}]
  %s2 = inlined_call_operand.vmem [shape: f32[1,128], index: 2, kind: input, shape index: {}]
  %s3 = inlined_call_operand.vmem [shape: f32[1,128], index: 3, kind: input, shape index: {}]
  %s4 = inlined_call_operand.hbm [shape: f32[1,128], index: 4, kind: input, shape index: {}]
  %s5 = inlined_call_operand.vmem [shape: f32[16,128], index: 5, kind: input, shape index: {}]
  %s6 = inlined_call_operand.hbm [shape: f32[16,128], index: 6, kind: input, shape index: {}]
  %s7 = inlined_call_operand.vmem [shape: f32[1,128], index: 7, kind: input, shape index: {}]
  %s8 = inlined_call_operand.vmem [shape: f32[1,128], index: 8, kind: input, shape index: {}]
  %s9 = inlined_call_operand.vmem [shape: f32[4,1], index: 9, kind: output, shape index: {}]
  %s10 = sld [smem:[#allocation0]]
  $region70: #{tpu_custom_call.1} parent=0
    _
  %s12 = ssub.s32 1, %s10
  %s13 = scalar_select 0, %s12, %s10
  $region1: #{tpu_custom_call.1} parent=0
    #allocation7 [shape = 'u8[512]{0}', space=smem, size = 0x200, scoped, tag = 'input window, operand 0, single buffered']
    #allocation8 [shape = 's32[1]{0}', space=sflag, size = 0x4, scoped, tag = 'scoped memory for tpu_custom_call.1']
    #allocation9 [shape = 's32[1]{0}', space=sflag, size = 0x4, scoped, tag = 'scoped memory for tpu_custom_call.1']
    #allocation10 [shape = 'u8[65536]{0}', space=vmem, size = 0x10000, scoped, tag = 'input window, operand 1, single buffered']
    #allocation11 [shape = 'u8[512]{0}', space=vmem, size = 0x400, scoped, tag = 'input window, operand 4, single buffered']
    #allocation12 [shape = 's32[1]{0}', space=sflag, size = 0x4, scoped, tag = 'scoped memory for tpu_custom_call.1']
    #allocation13 [shape = 'u8[8192]{0}', space=vmem, size = 0x2000, scoped, tag = 'input window, operand 6, single buffered']
    %14 = vsyncpa [#allocation9], 0
    %15 = vsyncpa [#allocation8], 0
    %16 = vsyncpa [#allocation12], 0
    // Predicated region
    $region2: #{tpu_custom_call.1} parent=1 // pred_check
      _
    $region3: #{tpu_custom_call.1} parent=1 // pred_check_branch
      %18 = sbr.rel (0) target = $region5
    $region4: #{tpu_custom_call.1} parent=1 // pred_region
      %s20 = ssub.s32 16, 16
      %21 = vsyncadd [#allocation9], %s20
      %24 = dma.hbm_to_smem %s0, 16, [#allocation7], [#allocation9]
    $region5: #{tpu_custom_call.1} parent=1 // pred_fallthru
      _
    // Predicated region
    $region6: #{tpu_custom_call.1} parent=1 // pred_check
      _
    $region7: #{tpu_custom_call.1} parent=1 // pred_check_branch
      %26 = sbr.rel (0) target = $region9
    $region8: #{tpu_custom_call.1} parent=1 // pred_region
      %s28 = ssub.s32 2048, 2048
      %29 = vsyncadd [#allocation8], %s28
      %s30 = sshll.u32 [#allocation10], 4
      %s31 = int_to_ptr.vmem [resolvable:$true] %s30
      %36 = dma.hbm_to_vmem [thread:$0]  %s1, 2048, %s31, [#allocation8], 128, 128, 8
    $region9: #{tpu_custom_call.1} parent=1 // pred_fallthru
      _
    // Predicated region
    $region10: #{tpu_custom_call.1} parent=1 // pred_check
      _
    $region11: #{tpu_custom_call.1} parent=1 // pred_check_branch
      %38 = sbr.rel (0) target = $region13
    $region12: #{tpu_custom_call.1} parent=1 // pred_region
      _
    $region13: #{tpu_custom_call.1} parent=1 // pred_fallthru
      _
    // Predicated region
    $region14: #{tpu_custom_call.1} parent=1 // pred_check
      _
    $region15: #{tpu_custom_call.1} parent=1 // pred_check_branch
      %40 = sbr.rel (0) target = $region17
    $region16: #{tpu_custom_call.1} parent=1 // pred_region
      _
    $region17: #{tpu_custom_call.1} parent=1 // pred_fallthru
      _
    // Predicated region
    $region18: #{tpu_custom_call.1} parent=1 // pred_check
      _
    $region19: #{tpu_custom_call.1} parent=1 // pred_check_branch
      %42 = sbr.rel (0) target = $region21
    $region20: #{tpu_custom_call.1} parent=1 // pred_region
      %s44 = ssub.s32 16, 16
      %45 = vsyncadd [#allocation12], %s44
      %s47 = sshll.u32 [#allocation11], 4
      %s48 = int_to_ptr.vmem [resolvable:$true] %s47
      %50 = dma.hbm_to_vmem [thread:$0]  %s4, 16, %s48, [#allocation12]
    $region21: #{tpu_custom_call.1} parent=1 // pred_fallthru
      _
    // Predicated region
    $region22: #{tpu_custom_call.1} parent=1 // pred_check
      _
    $region23: #{tpu_custom_call.1} parent=1 // pred_check_branch
      %52 = sbr.rel (0) target = $region25
    $region24: #{tpu_custom_call.1} parent=1 // pred_region
      _
    $region25: #{tpu_custom_call.1} parent=1 // pred_fallthru
      _
    // Predicated region
    $region26: #{tpu_custom_call.1} parent=1 // pred_check
      _
    $region27: #{tpu_custom_call.1} parent=1 // pred_check_branch
      %54 = sbr.rel (0) target = $region29
    $region28: #{tpu_custom_call.1} parent=1 // pred_region
      %s56 = ssub.s32 256, 256
      %57 = vsyncadd [#allocation12], %s56
      %s58 = sshll.u32 [#allocation13], 4
      %s59 = int_to_ptr.vmem [resolvable:$true] %s58
      %64 = dma.hbm_to_vmem [thread:$0]  %s6, 256, %s59, [#allocation12], 128, 128, 8
    $region29: #{tpu_custom_call.1} parent=1 // pred_fallthru
      _
    // Predicated region
    $region30: #{tpu_custom_call.1} parent=1 // pred_check
      _
    $region31: #{tpu_custom_call.1} parent=1 // pred_check_branch
      %66 = sbr.rel (0) target = $region33
    $region32: #{tpu_custom_call.1} parent=1 // pred_region
      _
    $region33: #{tpu_custom_call.1} parent=1 // pred_fallthru
      _
    // Predicated region
    $region34: #{tpu_custom_call.1} parent=1 // pred_check
      _
    $region35: #{tpu_custom_call.1} parent=1 // pred_check_branch
      %68 = sbr.rel (0) target = $region37
    $region36: #{tpu_custom_call.1} parent=1 // pred_region
      _
    $region37: #{tpu_custom_call.1} parent=1 // pred_fallthru
      _
    // Predicated region
    $region38: #{tpu_custom_call.1} parent=1 // pred_check
      _
    $region39: #{tpu_custom_call.1} parent=1 // pred_check_branch
      %70 = sbr.rel (0) target = $region41
    $region40: #{tpu_custom_call.1} parent=1 // pred_region
      %71 = dma.done [#allocation9], 16
    $region41: #{tpu_custom_call.1} parent=1 // pred_fallthru
      _
    // Predicated region
    $region42: #{tpu_custom_call.1} parent=1 // pred_check
      _
    $region43: #{tpu_custom_call.1} parent=1 // pred_check_branch
      %73 = sbr.rel (0) target = $region45
    $region44: #{tpu_custom_call.1} parent=1 // pred_region
      %74 = dma.done [#allocation8], 2048
    $region45: #{tpu_custom_call.1} parent=1 // pred_fallthru
      _
    // Predicated region
    $region46: #{tpu_custom_call.1} parent=1 // pred_check
      _
    $region47: #{tpu_custom_call.1} parent=1 // pred_check_branch
      %76 = sbr.rel (0) target = $region49
    $region48: #{tpu_custom_call.1} parent=1 // pred_region
      %77 = dma.done [#allocation12], 16
    $region49: #{tpu_custom_call.1} parent=1 // pred_fallthru
      _
    // Predicated region
    $region50: #{tpu_custom_call.1} parent=1 // pred_check
      _
    $region51: #{tpu_custom_call.1} parent=1 // pred_check_branch
      %79 = sbr.rel (0) target = $region53
    $region52: #{tpu_custom_call.1} parent=1 // pred_region
      %80 = dma.done [#allocation12], 256
    $region53: #{tpu_custom_call.1} parent=1 // pred_fallthru
      _
    %81 = sfence
    %s82 = sld [smem:[#allocation7]]
    %s83 = sld [smem:[#allocation7 + $0x1]]
    %s84 = sld [smem:[#allocation7 + $0x2]]
    %s85 = sld [smem:[#allocation7 + $0x3]]
    %p86 = scmp.eq.s32.totalorder 0, 0
    // Predicated region
    $region54: #{tpu_custom_call.1} parent=1 // pred_check
      %p87 = pneg %p86
    $region55: #{tpu_custom_call.1} parent=1 // pred_check_branch
      %89 = sbr.rel (%p87) target = $region57
    $region56: #{tpu_custom_call.1} parent=1 // pred_region
      %v90 = vld [vmem:[%s5] sm:$0xff]
      %v91 = vld [vmem:[%s5 + $0x8] sm:$0xff]
      %v92 = vld [vmem:[#allocation13] sm:$0xff]
      %v93 = vld [vmem:[#allocation13 + $0x8] sm:$0xff]
      %v94 = vld [vmem:[%s7] sm:$0x1]
      %vm95 = vcmp.eq.f32.partialorder %v90, 0.0
      %vm96 = vcmp.eq.f32.partialorder %v91, 0.0
      %v97 = vsel %vm95, 0.0, %v90
      %v98 = vsel %vm96, 0.0, %v91
      %v100 = vlaneseq
      %v101 = vshrl.u32 %v100, 7
      %v102 = vsub.s32 0, %v101
      %v103 = vrot.slane %v94, %v102
      %v105 = vmul.f32 %v97, %v103
      %v106 = vmul.f32 %v98, %v103
      %107 = vst [vmem:[#allocation2] sm:$0xff] %v105
      %108 = vst [vmem:[#allocation2 + $0x8] sm:$0xff] %v106
      %v109 = vsel %vm95, %v92, 0.0
      %v110 = vsel %vm96, %v93, 0.0
      %v111 = vmul.f32 %v109, %v103
      %v112 = vmul.f32 %v110, %v103
      %113 = vadd.xlane.f32.xlu0 %v111
      %v114 = vpop.xlane.xlu0 %113
      %115 = vadd.xlane.f32.xlu0 %v112
      %v116 = vpop.xlane.xlu0 %115
      %v117 = vstv %s82
      %v118 = vadd.f32 %v114, %v117
      %v119 = vadd.f32 %v116, %v117
      %vm120 = vcmask 7168
      %121 = vst.msk [vmem:[#allocation3] sm:$0xff] %vm120, %v118
      %122 = vst.msk [vmem:[#allocation3 + $0x8] sm:$0xff] %vm120, %v119
      %vm123 = vcmask 0
      %124 = vst.msk [vmem:[#allocation4] sm:$0x1] %vm123, 0.0
      %125 = vst.msk [vmem:[#allocation5] sm:$0x1] %vm123, 0.0
      %126 = vst.msk [vmem:[#allocation6] sm:$0x1] %vm123, 0.0
    $region57: #{tpu_custom_call.1} parent=1 // pred_fallthru
      _
    %v127 = vld [vmem:[#allocation10] sm:$0xff]
    %v128 = vld [vmem:[#allocation10 + $0x8] sm:$0xff]
    %v129 = vld [vmem:[#allocation10 + $0x10] sm:$0xff]
    %v130 = vld [vmem:[#allocation10 + $0x18] sm:$0xff]
    %v131 = vld [vmem:[#allocation10 + $0x20] sm:$0xff]
    %v132 = vld [vmem:[#allocation10 + $0x28] sm:$0xff]
    %v133 = vld [vmem:[#allocation10 + $0x30] sm:$0xff]
    %v134 = vld [vmem:[#allocation10 + $0x38] sm:$0xff]
    %v135 = vld [vmem:[#allocation10 + $0x40] sm:$0xff]
    %v136 = vld [vmem:[#allocation10 + $0x48] sm:$0xff]
    %v137 = vld [vmem:[#allocation10 + $0x50] sm:$0xff]
    %v138 = vld [vmem:[#allocation10 + $0x58] sm:$0xff]
    %v139 = vld [vmem:[#allocation10 + $0x60] sm:$0xff]
    %v140 = vld [vmem:[#allocation10 + $0x68] sm:$0xff]
    %v141 = vld [vmem:[#allocation10 + $0x70] sm:$0xff]
    %v142 = vld [vmem:[#allocation10 + $0x78] sm:$0xff]
    %v143 = vld [vmem:[#allocation2] sm:$0xff]
    %v144 = vld [vmem:[#allocation2 + $0x8] sm:$0xff]
    %v145 = vld [vmem:[#allocation3] sm:$0xff]
    %v146 = vld [vmem:[#allocation3 + $0x8] sm:$0xff]
    %148 = vset.pattern.permute.xlu0 0
    %149 = vperm.xlu0 %148, %v145
    %v150 = vpop.permute.xlu0 %149
    %153 = vset.pattern.permute.xlu0 0
    %154 = vperm.xlu0 %153, %v146
    %v155 = vpop.permute.xlu0 %154
    %157 = vmatprep.subr.mxu0 0.0
    %158 = vmatpush1.xpose.msra.mxu0 %v127
    %159 = vmatprep.subr.mxu0 0.0
    %160 = vmatpush1.xpose.msra.mxu0 %v128
    %161 = vmatprep.subr.mxu0 0.0
    %162 = vmatpush1.xpose.msra.mxu0 %v129
    %163 = vmatprep.subr.mxu0 0.0
    %164 = vmatpush1.xpose.msra.mxu0 %v130
    %165 = vmatprep.subr.mxu0 0.0
    %166 = vmatpush1.xpose.msra.mxu0 %v131
    %167 = vmatprep.subr.mxu0 0.0
    %168 = vmatpush1.xpose.msra.mxu0 %v132
    %169 = vmatprep.subr.mxu0 0.0
    %170 = vmatpush1.xpose.msra.mxu0 %v133
    %171 = vmatprep.subr.mxu0 0.0
    %172 = vmatpush1.xpose.msra.mxu0 %v134
    %173 = vmatprep.subr.mxu0 0.0
    %174 = vmatpush1.xpose.msra.mxu0 %v135
    %175 = vmatprep.subr.mxu0 0.0
    %176 = vmatpush1.xpose.msra.mxu0 %v136
    %177 = vmatprep.subr.mxu0 0.0
    %178 = vmatpush1.xpose.msra.mxu0 %v137
    %179 = vmatprep.subr.mxu0 0.0
    %180 = vmatpush1.xpose.msra.mxu0 %v138
    %181 = vmatprep.subr.mxu0 0.0
    %182 = vmatpush1.xpose.msra.mxu0 %v139
    %183 = vmatprep.subr.mxu0 0.0
    %184 = vmatpush1.xpose.msra.mxu0 %v140
    %185 = vmatprep.subr.mxu0 0.0
    %186 = vmatpush1.xpose.msra.mxu0 %v141
    %187 = vmatprep.subr.mxu0 0.0
    %188 = vmatpush1.xpose.msra.mxu0 %v142
    %189 = vmatprep.subr.mxu0 0.0
    %190 = vmatpush1.xpose.msra.mxu0 0.0
    %191 = vmatprep.subr.mxu0 0.0
    %192 = vmatpush1.xpose.msra.mxu0 0.0
    %193 = vmatprep.subr.mxu0 0.0
    %194 = vmatpush1.xpose.msra.mxu0 0.0
    %195 = vmatprep.subr.mxu0 0.0
    %196 = vmatpush1.xpose.msra.mxu0 0.0
    %197 = vmatprep.subr.mxu0 0.0
    %198 = vmatpush1.xpose.msra.mxu0 0.0
    %199 = vmatprep.subr.mxu0 0.0
    %200 = vmatpush1.xpose.msra.mxu0 0.0
    %201 = vmatprep.subr.mxu0 0.0
    %202 = vmatpush1.xpose.msra.mxu0 0.0
    %203 = vmatprep.subr.mxu0 0.0
    %204 = vmatpush1.xpose.msra.mxu0 0.0
    %205 = vmatprep.subr.mxu0 0.0
    %206 = vmatpush1.xpose.msra.mxu0 0.0
    %207 = vmatprep.subr.mxu0 0.0
    %208 = vmatpush1.xpose.msra.mxu0 0.0
    %209 = vmatprep.subr.mxu0 0.0
    %210 = vmatpush1.xpose.msra.mxu0 0.0
    %211 = vmatprep.subr.mxu0 0.0
    %212 = vmatpush1.xpose.msra.mxu0 0.0
    %213 = vmatprep.subr.mxu0 0.0
    %214 = vmatpush1.xpose.msra.mxu0 0.0
    %215 = vmatprep.subr.mxu0 0.0
    %216 = vmatpush1.xpose.msra.mxu0 0.0
    %217 = vmatprep.subr.mxu0 0.0
    %218 = vmatpush1.xpose.msra.mxu0 0.0
    %219 = vmatprep.subr.mxu0 0.0
    %220 = vmatpush1.xpose.msra.mxu0 0.0
    %221 = vmatprep.mubr.f32.mxu0 0.0
    %222 = vmatmul.mubr.f32.gmra.mrb[0].mxu0 %v143
    %v223 = vpop.f32.mrb[0].mxu0
    %v224 = vadd.f32 %v150, %v223
    %v225 = vpop.f32.mrb[0].mxu0
    %226 = vmatprep.mubr.f32.mxu0 0.0
    %227 = vmatmul.mubr.f32.gmra.mrb[0].mxu0 %v144
    %v228 = vpop.f32.mrb[0].mxu0
    %v229 = vadd.f32 %v155, %v228
    %v230 = vpop.f32.mrb[0].mxu0
    %231 = vdwg.mxu0
    %v232 = vrot.slane %v224, 4
    %v233 = vmax.f32 %v224, %v232
    %v234 = vrot.slane %v233, 2
    %v235 = vmax.f32 %v233, %v234
    %v236 = vrot.slane %v235, 1
    %v237 = vmax.f32 %v235, %v236
    %v238 = vld [vmem:[#allocation11] sm:$0x1]
    %vm239 = vcmp.gt.f32.partialorder %v229, 0.0
    %v240 = vsel %vm239, %v238, 0.0
    %v241 = vxor.u32 %v237, 2147483648
    %v242 = vmul.f32 %v241, 1.442695
    %v243 = vpow.pop %v242
    %v244 = vadd.f32 %v243, 1.0
    %v245 = vrcp.pop %v244
    %v246 = vmul.f32 1.0, %v245
    %v247 = vsub.f32 %v246, 0.5
    %v248 = vmin.f32 %v247, 0.05
    %v249 = vld [vmem:[#allocation5] sm:$0x1]
    %v250 = vmul.f32 %v248, %v240
    %vm251 = vcmask 1040384
    %v252 = vsel %vm251, %v250, 0.0
    %253 = vadd.xlane.f32.xlu0 %v252
    %v254 = vpop.xlane.xlu0 %253
    %v255 = vadd.f32 %v249, %v254
    %vm256 = vcmask 0
    %257 = vst.msk [vmem:[#allocation5] sm:$0x1] %vm256, %v255
    %v258 = vld [vmem:[#allocation6] sm:$0x1]
    %v259 = vsel %vm251, %v240, 0.0
    %260 = vadd.xlane.f32.xlu0 %v259
    %v261 = vpop.xlane.xlu0 %260
    %v262 = vadd.f32 %v258, %v261
    %263 = vst.msk [vmem:[#allocation6] sm:$0x1] %vm256, %v262
    %v264 = vld [vmem:[%s2] sm:$0x1]
    %v265 = vld [vmem:[%s3] sm:$0x1]
    %v266 = vlog2.pop %v264
    %v267 = vmul.f32 %v266, 0.6931472
    %v268 = vmax.f32 %v267, -100.0
    %v269 = vsub.f32 1.0, %v264
    %v270 = vlog2.pop %v269
    %v271 = vmul.f32 %v270, 0.6931472
    %v272 = vmax.f32 %v271, -100.0
    %v273 = vmul.f32 %v265, %v268
    %v274 = vsub.f32 1.0, %v265
    %v275 = vmul.f32 %v274, %v272
    %v276 = vadd.f32 %v273, %v275
    %v277 = vsub.f32 0.0, %v276
    %v278 = vmul.f32 %v277, %v238
    %v279 = vld [vmem:[#allocation4] sm:$0x1]
    %v280 = vsel %vm251, %v278, 0.0
    %281 = vadd.xlane.f32.xlu0 %v280
    %v282 = vpop.xlane.xlu0 %281
    %v283 = vadd.f32 %v279, %v282
    %284 = vst.msk [vmem:[#allocation4] sm:$0x1] %vm256, %v283
    // Predicated region
    $region58: #{tpu_custom_call.1} parent=1 // pred_check
      %p285 = pneg %p86
    $region59: #{tpu_custom_call.1} parent=1 // pred_check_branch
      %287 = sbr.rel (%p285) target = $region61
    $region60: #{tpu_custom_call.1} parent=1 // pred_region
      %v288 = vld [vmem:[%s8] sm:$0x1]
      %v289 = vld [vmem:[%s7] sm:$0x1]
      %v290 = vmul.f32 %v288, %v289
      %v291 = vsel %vm251, %v290, 0.0
      %292 = vadd.xlane.f32.xlu0 %v291
      %v293 = vpop.xlane.xlu0 %292
      %v294 = vstv %s82
      %v295 = vadd.f32 %v293, %v294
      %v296 = vxor.u32 %v295, 2147483648
      %v297 = vmul.f32 %v296, 1.442695
      %v298 = vpow.pop %v297
      %v299 = vadd.f32 %v298, 1.0
      %v300 = vrcp.pop %v299
      %v301 = vmul.f32 1.0, %v300
      %v302 = vsub.f32 %v301, 0.5
      %v303 = vmax.f32 %v302, -0.05
      %v304 = vstv %s84
      %v305 = vmul.f32 %v304, %v303
      %v306 = vld [vmem:[#allocation5] sm:$0x1]
      %v307 = vsub.f32 0.0, %v306
      %v308 = vld [vmem:[#allocation6] sm:$0x1]
      %v309 = vadd.f32 %v308, 1e-10
      %v310 = vrcp.pop %v309
      %v311 = vmul.f32 %v307, %v310
      %v312 = vstv %s83
      %v313 = vmul.f32 %v312, %v311
      %v314 = vld [vmem:[#allocation4] sm:$0x1]
      %v315 = vstv %s85
      %v316 = vmul.f32 %v314, %v315
      %v317 = vadd.f32 %v316, %v313
      %v318 = vadd.f32 %v317, %v305
      %v319 = vlaneseq
      %v320 = vshrl.u32 %v319, 7
      %vm321 = vcmp.eq.s32.totalorder %v320, 0
      %vm322 = vcmp.eq.s32.totalorder %v320, 1
      %vm323 = vcmp.eq.s32.totalorder %v320, 2
      %v324 = vlaneseq
      %v325 = vshrl.u32 %v324, 7
      %v326 = vsub.s32 0, %v325
      %v327 = vrot.slane %v305, %v326
      %v329 = vlaneseq
      %v330 = vshrl.u32 %v329, 7
      %v331 = vsub.s32 0, %v330
      %v332 = vrot.slane %v318, %v331
      %v334 = vsel %vm323, %v327, %v332
      %v336 = vlaneseq
      %v337 = vshrl.u32 %v336, 7
      %v338 = vsub.s32 0, %v337
      %v339 = vrot.slane %v313, %v338
      %v341 = vsel %vm322, %v339, %v334
      %v343 = vlaneseq
      %v344 = vshrl.u32 %v343, 7
      %v345 = vsub.s32 0, %v344
      %v346 = vrot.slane %v316, %v345
      %v348 = vsel %vm321, %v346, %v341
      %vm349 = vcmask 3072
      %350 = vst.msk [vmem:[%s9] sm:$0xf] %vm349, %v348
    $region61: #{tpu_custom_call.1} parent=1 // pred_fallthru
      _
    // Predicated region
    $region62: #{tpu_custom_call.1} parent=1 // pred_check
      _
    $region63: #{tpu_custom_call.1} parent=1 // pred_check_branch
      %352 = sbr.rel (0) target = $region65
    $region64: #{tpu_custom_call.1} parent=1 // pred_region
      _
    $region65: #{tpu_custom_call.1} parent=1 // pred_fallthru
      _
    // Predicated region
    $region66: #{tpu_custom_call.1} parent=1 // pred_check
      _
    $region67: #{tpu_custom_call.1} parent=1 // pred_check_branch
      %354 = sbr.rel (0) target = $region69
    $region68: #{tpu_custom_call.1} parent=1 // pred_region
      _
    $region69: #{tpu_custom_call.1} parent=1 // pred_fallthru
      _
    %355 = vsyncpa [#allocation8], 1
    %356 = vsyncpa [#allocation12], 1
    %357 = vsyncpa [#allocation9], 1

</llo_original>
